<compile_context>
chip_gen: v7x
topology: tpu7x:2x2x1
jax: 0.10.0
libtpu: 0.0.40
codegen_flags: <defaults>
</compile_context>

<pallas_src>
import functools

import jax
import jax.numpy as jnp
from jax.experimental import pallas as pl
from jax.experimental.pallas import tpu as pltpu


def _pick_block_rows(batch):
    """Largest row tile <= 256 that divides the batch (multiple of 8 sublanes)."""
    for tb in (256, 128, 64, 32, 16, 8):
        if batch % tb == 0:
            return tb
    return batch  # small / odd batch: single full-extent block


def _npair_loss_kernel(anchor_ref, positive_ref, tcol_ref, trow_ref, out_ref,
                       *, ce_scale, l2_scale, block_rows):
    tile = pl.program_id(0)

    a = anchor_ref[...]                                   # (TB, D) native dtype
    p = positive_ref[...]                                 # (B,  D) native dtype
    tcol = tcol_ref[...]                                  # (TB, 1) int32
    trow = trow_ref[...]                                  # (1,  B) int32

    # logit tile: anchor_tile @ positive.T  (MXU, f32 accumulation)
    logits = jax.lax.dot_general(
        a, p, (((1,), (1,)), ((), ())),
        preferred_element_type=jnp.float32)               # (TB, B)

    # Numerically stable row log-sum-exp.
    m = jnp.max(logits, axis=-1, keepdims=True)           # (TB, 1)
    lse = jnp.log(jnp.sum(jnp.exp(logits - m), axis=-1, keepdims=True))

    # Soft-target cross entropy without materializing log_softmax.
    # Each normalized target row sums to exactly 1, therefore
    #   sum_j tmat_ij * (-log_softmax_ij)
    #     = (m_i + lse_i) - (1/rowsum_i) * sum_j eq_ij * logits_ij
    eq = (tcol == trow).astype(jnp.float32)               # (TB, B)
    rowsum = jnp.sum(eq, axis=-1, keepdims=True)          # (TB, 1), exact >= 1
    # Exact reciprocal: only TB values, and approx=True would perturb the
    # row-normalization the algebraic identity above relies on.
    inv_rowsum = pl.reciprocal(rowsum, approx=False)
    row_dot = jnp.sum(eq * logits, axis=-1, keepdims=True) * inv_rowsum
    per_row_ce = (m + lse) - row_dot                      # (TB, 1)

    # Per-row L2 penalty for this tile's rows: ||a_i||^2 + ||p_i||^2 (f32).
    # Positive rows are sliced out of the resident block (VMEM-only read,
    # aligned dynamic start) so nothing is counted twice across tiles.
    row0 = pl.multiple_of(tile * block_rows, block_rows)
    p_tile = positive_ref[pl.ds(row0, block_rows), :]     # (TB, D)
    a32 = a.astype(jnp.float32)
    p32 = p_tile.astype(jnp.float32)
    l2_rows = (jnp.sum(a32 * a32, axis=-1, keepdims=True)
               + jnp.sum(p32 * p32, axis=-1, keepdims=True))

    # loss = mean_i(ce_i) + l2_reg * 0.25 * (sum||a||^2 + sum||p||^2) / B
    #      = sum_i [ ce_i * (1/B) + (l2_reg*0.25/B) * (||a_i||^2 + ||p_i||^2) ]
    out_ref[...] = per_row_ce * ce_scale + l2_rows * l2_scale


def npair_loss(anchor, positive, target, l2_reg=0.02, block_rows=None):
    """Pallas-TPU implementation of NpairLoss.forward (returns a scalar loss)."""
    B, D = anchor.shape
    if block_rows is None:
        block_rows = _pick_block_rows(B)
    assert B % block_rows == 0, "block_rows must divide the batch size"
    num_tiles = B // block_rows

    tcol = target.reshape(B, 1).astype(jnp.int32)
    trow = target.reshape(1, B).astype(jnp.int32)

    kernel = functools.partial(
        _npair_loss_kernel,
        ce_scale=1.0 / B,
        l2_scale=float(l2_reg) * 0.25 / B,
        block_rows=block_rows)

    # Explicit scoped-VMEM budget: double-buffered anchor tiles, resident
    # positive block, small label/output blocks, and the (TB, B) f32
    # temporaries (logits / eq / exp live values, with headroom).
    itemsize = jnp.dtype(anchor.dtype).itemsize
    vmem_est = (2 * block_rows * D * itemsize          # anchor tile (x2 buffers)
                + 2 * B * D * itemsize                 # resident positive (+slack)
                + 2 * (block_rows + B) * 4             # label blocks
                + 2 * block_rows * 4                   # output blocks
                + 6 * block_rows * B * 4)              # (TB, B) f32 temporaries
    vmem_limit = int(min(max(vmem_est + (4 << 20), 16 << 20), 64 << 20))

    # Advisory cost: one (B, B, D) matmul, ~B*B exp's, inputs+labels+output.
    cost = pl.CostEstimate(
        flops=2 * B * B * D + 10 * B * B,
        transcendentals=B * B,
        bytes_accessed=(B + num_tiles * B) * D * itemsize + 8 * B + 4 * B)

    per_row = pl.pallas_call(
        kernel,
        out_shape=jax.ShapeDtypeStruct((B, 1), jnp.float32),
        grid=(num_tiles,),
        in_specs=[
            pl.BlockSpec((block_rows, D), lambda i: (i, 0)),   # anchor row tile
            pl.BlockSpec((B, D), lambda i: (0, 0)),            # positive (resident)
            pl.BlockSpec((block_rows, 1), lambda i: (i, 0)),   # target column tile
            pl.BlockSpec((1, B), lambda i: (0, 0)),            # target row (resident)
        ],
        out_specs=pl.BlockSpec((block_rows, 1), lambda i: (i, 0)),
        compiler_params=pltpu.CompilerParams(
            dimension_semantics=("parallel",),   # independent row tiles (megacore on v7x)
            vmem_limit_bytes=vmem_limit),
        cost_estimate=cost,
    )(anchor, positive, tcol, trow)

    # Tiny final reduction over the per-row partial losses.
    return jnp.sum(per_row)


def _npair_loss_ref(anchor, positive, target, l2_reg=0.02):
    """Pure-JAX reference mirroring the PyTorch module, for verification."""
    B = anchor.shape[0]
    t = target.reshape(B, 1)
    tmat = (t == t.T).astype(jnp.float32)
    tmat = tmat / jnp.sum(tmat, axis=1, keepdims=True)
    logit = anchor @ positive.T
    log_sm = jax.nn.log_softmax(logit, axis=-1)
    loss_ce = jnp.mean(jnp.sum(-tmat * log_sm, axis=-1))
    l2 = jnp.sum(anchor ** 2) / B + jnp.sum(positive ** 2) / B
    return loss_ce + l2_reg * l2 * 0.25


if __name__ == "__main__":
    # NpairLoss has no learnable parameters (l2_reg is a constant hyperparam).
    key = jax.random.PRNGKey(0)
    k_a, k_p, k_t = jax.random.split(key, 3)

    B, D = 8, 32
    anchor = jax.random.normal(k_a, (B, D), dtype=jnp.float32)
    positive = jax.random.normal(k_p, (B, D), dtype=jnp.float32)
    # Small label range so some labels collide (exercises the row-normalize path).
    target = jax.random.randint(k_t, (B,), 0, 4, dtype=jnp.int32)

    loss = npair_loss(anchor, positive, target, l2_reg=0.02)
    jax.block_until_ready(loss)

    ref = _npair_loss_ref(anchor, positive, target, l2_reg=0.02)
    assert jnp.allclose(loss, ref, rtol=1e-5, atol=1e-5), (loss, ref)

    print("KERNEL_OK")
</pallas_src>

<mosaic_0001>
module attributes {stable_mosaic.version = 11 : i64} {
  func.func @_npair_loss_kernel(%arg0: i32, %arg1: memref<8x32xf32, #tpu.memory_space<vmem>>, %arg2: memref<8x32xf32, #tpu.memory_space<vmem>>, %arg3: memref<8x1xi32, #tpu.memory_space<vmem>>, %arg4: memref<1x8xi32, #tpu.memory_space<vmem>>, %arg5: memref<8x1xf32, #tpu.memory_space<vmem>>) attributes {dimension_semantics = [#tpu.dimension_semantics<parallel>], iteration_bounds = array<i64: 1>, scalar_prefetch = 0 : i64, scratch_operands = 0 : i64, tpu.core_type = #tpu.core_type<tc>, window_params = [{transform_indices = @transform_0, window_bounds = array<i64: 8, 32>}, {pipeline_mode = #tpu.pipeline_mode<synchronous>, transform_indices = @transform_1, window_bounds = array<i64: 8, 32>}, {transform_indices = @transform_2, window_bounds = array<i64: 8, 1>}, {pipeline_mode = #tpu.pipeline_mode<synchronous>, transform_indices = @transform_3, window_bounds = array<i64: 1, 8>}, {transform_indices = @transform_4, window_bounds = array<i64: 8, 1>}]} {
    %c0 = arith.constant 0 : index
    %c0_0 = arith.constant 0 : index
    %0 = vector.load %arg1[%c0, %c0_0] : memref<8x32xf32, #tpu.memory_space<vmem>>, vector<8x32xf32>
    %c0_1 = arith.constant 0 : index
    %c0_2 = arith.constant 0 : index
    %1 = vector.load %arg2[%c0_1, %c0_2] : memref<8x32xf32, #tpu.memory_space<vmem>>, vector<8x32xf32>
    %c0_3 = arith.constant 0 : index
    %c0_4 = arith.constant 0 : index
    %2 = vector.load %arg3[%c0_3, %c0_4] : memref<8x1xi32, #tpu.memory_space<vmem>>, vector<8x1xi32>
    %c0_5 = arith.constant 0 : index
    %c0_6 = arith.constant 0 : index
    %3 = vector.load %arg4[%c0_5, %c0_6] : memref<1x8xi32, #tpu.memory_space<vmem>>, vector<1x8xi32>
    %cst = arith.constant dense<0.000000e+00> : vector<8x8xf32>
    %4 = tpu.matmul %0, %1, %cst {dimension_numbers = #tpu.dot_dimension_numbers<[1], [1], [0], [0], [0, 0, 1, 0], [], []>} : vector<8x32xf32>, vector<8x32xf32>, vector<8x8xf32> -> vector<8x8xf32>
    %cst_7 = arith.constant dense<0xFF800000> : vector<8xf32>
    %5 = vector.multi_reduction <maximumf>, %4, %cst_7 [1] : vector<8x8xf32> to vector<8xf32>
    %6 = vector.shape_cast %5 : vector<8xf32> to vector<8x1xf32>
    %7 = vector.broadcast %6 : vector<8x1xf32> to vector<8x8xf32>
    %8 = arith.subf %4, %7 : vector<8x8xf32>
    %9 = math.exp %8 : vector<8x8xf32>
    %cst_8 = arith.constant dense<0.000000e+00> : vector<8xf32>
    %10 = vector.multi_reduction <add>, %9, %cst_8 [1] : vector<8x8xf32> to vector<8xf32>
    %11 = vector.shape_cast %10 : vector<8xf32> to vector<8x1xf32>
    %12 = math.log %11 : vector<8x1xf32>
    %13 = vector.broadcast %2 : vector<8x1xi32> to vector<8x8xi32>
    %14 = vector.broadcast %3 : vector<1x8xi32> to vector<8x8xi32>
    %15 = arith.cmpi eq, %13, %14 : vector<8x8xi32>
    %16 = arith.extui %15 : vector<8x8xi1> to vector<8x8xi32>
    %17 = arith.sitofp %16 : vector<8x8xi32> to vector<8x8xf32>
    %cst_9 = arith.constant dense<0.000000e+00> : vector<8xf32>
    %18 = vector.multi_reduction <add>, %17, %cst_9 [1] : vector<8x8xf32> to vector<8xf32>
    %19 = vector.shape_cast %18 : vector<8xf32> to vector<8x1xf32>
    %20 = tpu.reciprocal %19 : vector<8x1xf32> -> vector<8x1xf32>
    %21 = arith.mulf %17, %4 : vector<8x8xf32>
    %cst_10 = arith.constant dense<0.000000e+00> : vector<8xf32>
    %22 = vector.multi_reduction <add>, %21, %cst_10 [1] : vector<8x8xf32> to vector<8xf32>
    %23 = vector.shape_cast %22 : vector<8xf32> to vector<8x1xf32>
    %24 = arith.mulf %23, %20 : vector<8x1xf32>
    %25 = arith.addf %6, %12 : vector<8x1xf32>
    %26 = arith.subf %25, %24 : vector<8x1xf32>
    %c8_i32 = arith.constant 8 : i32
    %27 = arith.muli %arg0, %c8_i32 : i32
    %28 = tpu.assume_multiple %27, 8 : i32
    %29 = arith.index_cast %28 : i32 to index
    %c0_11 = arith.constant 0 : index
    %30 = vector.load %arg2[%29, %c0_11] : memref<8x32xf32, #tpu.memory_space<vmem>>, vector<8x32xf32>
    %31 = arith.mulf %0, %0 : vector<8x32xf32>
    %cst_12 = arith.constant dense<0.000000e+00> : vector<8xf32>
    %32 = vector.multi_reduction <add>, %31, %cst_12 [1] : vector<8x32xf32> to vector<8xf32>
    %33 = vector.shape_cast %32 : vector<8xf32> to vector<8x1xf32>
    %34 = arith.mulf %30, %30 : vector<8x32xf32>
    %cst_13 = arith.constant dense<0.000000e+00> : vector<8xf32>
    %35 = vector.multi_reduction <add>, %34, %cst_13 [1] : vector<8x32xf32> to vector<8xf32>
    %36 = vector.shape_cast %35 : vector<8xf32> to vector<8x1xf32>
    %37 = arith.addf %33, %36 : vector<8x1xf32>
    %cst_14 = arith.constant 1.250000e-01 : f32
    %38 = vector.broadcast %cst_14 : f32 to vector<8x1xf32>
    %39 = arith.mulf %26, %38 : vector<8x1xf32>
    %cst_15 = arith.constant 6.250000e-04 : f32
    %40 = vector.broadcast %cst_15 : f32 to vector<8x1xf32>
    %41 = arith.mulf %37, %40 : vector<8x1xf32>
    %42 = arith.addf %39, %41 : vector<8x1xf32>
    %c0_16 = arith.constant 0 : index
    %c0_17 = arith.constant 0 : index
    %43 = vector.load %arg5[%c0_16, %c0_17] : memref<8x1xf32, #tpu.memory_space<vmem>>, vector<8x1xf32>
    tpu.vector_store %arg5[%c0_16, %c0_17], %42 {strides = array<i32>} : memref<8x1xf32, #tpu.memory_space<vmem>>, vector<8x1xf32>,
    return
  }
  func.func @transform_0(%arg0: i32) -> (i32, i32) {
    %c0_i32 = arith.constant 0 : i32
    %c0_i32_0 = arith.constant 0 : i32
    return %arg0, %c0_i32 : i32, i32
  }
  func.func @transform_1(%arg0: i32) -> (i32, i32) {
    %c0_i32 = arith.constant 0 : i32
    %c0_i32_0 = arith.constant 0 : i32
    %c0_i32_1 = arith.constant 0 : i32
    return %c0_i32, %c0_i32_0 : i32, i32
  }
  func.func @transform_2(%arg0: i32) -> (i32, i32) {
    %c0_i32 = arith.constant 0 : i32
    %c0_i32_0 = arith.constant 0 : i32
    return %arg0, %c0_i32 : i32, i32
  }
  func.func @transform_3(%arg0: i32) -> (i32, i32) {
    %c0_i32 = arith.constant 0 : i32
    %c0_i32_0 = arith.constant 0 : i32
    %c0_i32_1 = arith.constant 0 : i32
    return %c0_i32, %c0_i32_0 : i32, i32
  }
  func.func @transform_4(%arg0: i32) -> (i32, i32) {
    %c0_i32 = arith.constant 0 : i32
    %c0_i32_0 = arith.constant 0 : i32
    return %arg0, %c0_i32 : i32, i32
  }
}

</mosaic_0001>

<llo_original>
// kernel: tpu_custom_call.1
$region0: #{tpu_custom_call.1}
  #allocation0 [shape = 'u32[]', space=smem, size = 0x4, offset = 0x4, fixed_abs, tag = 'smem constant byte address 0x4 - core index']
  #allocation1 [shape = 'u32[144,128]{1,0:T(1,128)}', space=vmem, size = 0x12000, scoped, tag = 'internal scratch']
  %s0 = inlined_call_operand.vmem [shape: f32[8,32], index: 0, kind: input, shape index: {}]
  %s1 = inlined_call_operand.hbm [shape: f32[8,32], index: 1, kind: input, shape index: {}]
  %s2 = inlined_call_operand.vmem [shape: s32[8,1], index: 2, kind: input, shape index: {}]
  %s3 = inlined_call_operand.vmem [shape: s32[1,8], index: 3, kind: input, shape index: {}]
  %s4 = inlined_call_operand.vmem [shape: f32[8,1], index: 4, kind: output, shape index: {}]
  %s5 = sld [smem:[#allocation0]]
  $region30: #{tpu_custom_call.1} parent=0
    _
  %s7 = ssub.s32 1, %s5
  %s8 = scalar_select 0, %s7, %s5
  $region1: #{tpu_custom_call.1} parent=0
    #allocation2 [shape = 'u8[4096]{0}', space=vmem, size = 0x1000, scoped, tag = 'input window, operand 1, single buffered']
    #allocation3 [shape = 's32[1]{0}', space=sflag, size = 0x4, scoped, tag = 'scoped memory for tpu_custom_call.1']
    %9 = vsyncpa [#allocation3], 0
    // Predicated region
    $region2: #{tpu_custom_call.1} parent=1 // pred_check
      _
    $region3: #{tpu_custom_call.1} parent=1 // pred_check_branch
      %11 = sbr.rel (0) target = $region5
    $region4: #{tpu_custom_call.1} parent=1 // pred_region
      _
    $region5: #{tpu_custom_call.1} parent=1 // pred_fallthru
      _
    // Predicated region
    $region6: #{tpu_custom_call.1} parent=1 // pred_check
      _
    $region7: #{tpu_custom_call.1} parent=1 // pred_check_branch
      %13 = sbr.rel (0) target = $region9
    $region8: #{tpu_custom_call.1} parent=1 // pred_region
      %s15 = ssub.s32 128, 128
      %16 = vsyncadd [#allocation3], %s15
      %s18 = sshll.u32 [#allocation2], 4
      %s19 = int_to_ptr.vmem [resolvable:$true] %s18
      %21 = dma.hbm_to_vmem [thread:$0]  %s1, 128, %s19, [#allocation3]
    $region9: #{tpu_custom_call.1} parent=1 // pred_fallthru
      _
    // Predicated region
    $region10: #{tpu_custom_call.1} parent=1 // pred_check
      _
    $region11: #{tpu_custom_call.1} parent=1 // pred_check_branch
      %23 = sbr.rel (0) target = $region13
    $region12: #{tpu_custom_call.1} parent=1 // pred_region
      _
    $region13: #{tpu_custom_call.1} parent=1 // pred_fallthru
      _
    // Predicated region
    $region14: #{tpu_custom_call.1} parent=1 // pred_check
      _
    $region15: #{tpu_custom_call.1} parent=1 // pred_check_branch
      %25 = sbr.rel (0) target = $region17
    $region16: #{tpu_custom_call.1} parent=1 // pred_region
      _
    $region17: #{tpu_custom_call.1} parent=1 // pred_fallthru
      _
    // Predicated region
    $region18: #{tpu_custom_call.1} parent=1 // pred_check
      _
    $region19: #{tpu_custom_call.1} parent=1 // pred_check_branch
      %27 = sbr.rel (0) target = $region21
    $region20: #{tpu_custom_call.1} parent=1 // pred_region
      %28 = dma.done [#allocation3], 128
    $region21: #{tpu_custom_call.1} parent=1 // pred_fallthru
      _
    %v29 = vld [vmem:[%s0] sm:$0xff]
    %v30 = vld [vmem:[#allocation2] sm:$0xff]
    %v31 = vld [vmem:[%s2] sm:$0xff]
    %v32 = vld [vmem:[%s3] sm:$0x1]
    %vm33 = vcmask 261120
    %v35 = vsel %vm33, %v29, 0
    %v38 = vsel %vm33, %v30, 0
    %40 = vmatprep.subr.mxu0 0.0
    %41 = vmatpush1.xpose.msra.mxu0 %v38
    %42 = vmatprep.subr.mxu0 0.0
    %43 = vmatpush1.xpose.msra.mxu0 0.0
    %44 = vmatprep.subr.mxu0 0.0
    %45 = vmatpush1.xpose.msra.mxu0 0.0
    %46 = vmatprep.subr.mxu0 0.0
    %47 = vmatpush1.xpose.msra.mxu0 0.0
    %48 = vmatprep.subr.mxu0 0.0
    %49 = vmatpush1.xpose.msra.mxu0 0.0
    %50 = vmatprep.subr.mxu0 0.0
    %51 = vmatpush1.xpose.msra.mxu0 0.0
    %52 = vmatprep.subr.mxu0 0.0
    %53 = vmatpush1.xpose.msra.mxu0 0.0
    %54 = vmatprep.subr.mxu0 0.0
    %55 = vmatpush1.xpose.msra.mxu0 0.0
    %56 = vmatprep.subr.mxu0 0.0
    %57 = vmatpush1.xpose.msra.mxu0 0.0
    %58 = vmatprep.subr.mxu0 0.0
    %59 = vmatpush1.xpose.msra.mxu0 0.0
    %60 = vmatprep.subr.mxu0 0.0
    %61 = vmatpush1.xpose.msra.mxu0 0.0
    %62 = vmatprep.subr.mxu0 0.0
    %63 = vmatpush1.xpose.msra.mxu0 0.0
    %64 = vmatprep.subr.mxu0 0.0
    %65 = vmatpush1.xpose.msra.mxu0 0.0
    %66 = vmatprep.subr.mxu0 0.0
    %67 = vmatpush1.xpose.msra.mxu0 0.0
    %68 = vmatprep.subr.mxu0 0.0
    %69 = vmatpush1.xpose.msra.mxu0 0.0
    %70 = vmatprep.subr.mxu0 0.0
    %71 = vmatpush1.xpose.msra.mxu0 0.0
    %72 = vmatprep.subr.mxu0 0.0
    %73 = vmatpush1.xpose.msra.mxu0 0.0
    %74 = vmatprep.subr.mxu0 0.0
    %75 = vmatpush1.xpose.msra.mxu0 0.0
    %76 = vmatprep.subr.mxu0 0.0
    %77 = vmatpush1.xpose.msra.mxu0 0.0
    %78 = vmatprep.subr.mxu0 0.0
    %79 = vmatpush1.xpose.msra.mxu0 0.0
    %80 = vmatprep.subr.mxu0 0.0
    %81 = vmatpush1.xpose.msra.mxu0 0.0
    %82 = vmatprep.subr.mxu0 0.0
    %83 = vmatpush1.xpose.msra.mxu0 0.0
    %84 = vmatprep.subr.mxu0 0.0
    %85 = vmatpush1.xpose.msra.mxu0 0.0
    %86 = vmatprep.subr.mxu0 0.0
    %87 = vmatpush1.xpose.msra.mxu0 0.0
    %88 = vmatprep.subr.mxu0 0.0
    %89 = vmatpush1.xpose.msra.mxu0 0.0
    %90 = vmatprep.subr.mxu0 0.0
    %91 = vmatpush1.xpose.msra.mxu0 0.0
    %92 = vmatprep.subr.mxu0 0.0
    %93 = vmatpush1.xpose.msra.mxu0 0.0
    %94 = vmatprep.subr.mxu0 0.0
    %95 = vmatpush1.xpose.msra.mxu0 0.0
    %96 = vmatprep.subr.mxu0 0.0
    %97 = vmatpush1.xpose.msra.mxu0 0.0
    %98 = vmatprep.subr.mxu0 0.0
    %99 = vmatpush1.xpose.msra.mxu0 0.0
    %100 = vmatprep.subr.mxu0 0.0
    %101 = vmatpush1.xpose.msra.mxu0 0.0
    %102 = vmatprep.subr.mxu0 0.0
    %103 = vmatpush1.xpose.msra.mxu0 0.0
    %104 = vmatprep.mubr.f32.mxu0 0.0
    %105 = vmatmul.mubr.f32.gmra.mrb[0].mxu0 %v35
    %v106 = vpop.f32.mrb[0].mxu0
    %v107 = vadd.f32 0.0, %v106
    %v108 = vpop.f32.mrb[0].mxu0
    %109 = vdwg.mxu0
    %vm110 = vcmask 64512
    %v111 = vsel %vm110, %v107, -inf
    %112 = vmax.xlane.f32.xlu0 %v111
    %v113 = vpop.xlane.xlu0 %112
    %v114 = vsub.f32 %v107, %v113
    %v115 = vmul.f32 %v114, 1.442695
    %v116 = vpow.pop %v115
    %v117 = vsel %vm110, %v116, 0.0
    %118 = vadd.xlane.f32.xlu0 %v117
    %v119 = vpop.xlane.xlu0 %118
    %v120 = vlog2.pop %v119
    %v121 = vmul.f32 %v120, 0.6931472
    %122 = vset.pattern.permute.xlu0 0
    %123 = vperm.xlu0 %122, %v31
    %v124 = vpop.permute.xlu0 %123
    %v125 = vlaneseq
    %v126 = vshrl.u32 %v125, 7
    %v127 = vsub.s32 0, %v126
    %v128 = vrot.slane %v32, %v127
    %vm129 = vcmp.eq.s32.totalorder %v124, %v128
    %v130 = vsel %vm129, 1, 0
    %v131 = vcvt.s32.f32 %v130
    %v132 = vsel %vm110, %v131, 0.0
    %133 = vadd.xlane.f32.xlu0 %v132
    %v134 = vpop.xlane.xlu0 %133
    %v135 = vrcp.pop %v134
    %v136 = vmul.f32 %v131, %v107
    %v137 = vsel %vm110, %v136, 0.0
    %138 = vadd.xlane.f32.xlu0 %v137
    %v139 = vpop.xlane.xlu0 %138
    %v140 = vmul.f32 %v139, %v135
    %v141 = vadd.f32 %v113, %v121
    %v142 = vsub.f32 %v141, %v140
    %s143 = smul.u32 0, 8
    %s144 = scalar_lea.vmem [#allocation2], %s143
    %v145 = vld [vmem:[%s144] sm:$0xff]
    %v146 = vmul.f32 %v29, %v29
    %v147 = vsel %vm33, %v146, 0.0
    %148 = vadd.xlane.f32.xlu0 %v147
    %v149 = vpop.xlane.xlu0 %148
    %v150 = vmul.f32 %v145, %v145
    %v151 = vsel %vm33, %v150, 0.0
    %152 = vadd.xlane.f32.xlu0 %v151
    %v153 = vpop.xlane.xlu0 %152
    %v154 = vadd.f32 %v149, %v153
    %v155 = vmul.f32 %v142, 0.125
    %v156 = vmul.f32 %v154, 0.000625
    %v157 = vadd.f32 %v155, %v156
    %vm158 = vcmask 7168
    %159 = vst.msk [vmem:[%s4] sm:$0xff] %vm158, %v157
    // Predicated region
    $region22: #{tpu_custom_call.1} parent=1 // pred_check
      _
    $region23: #{tpu_custom_call.1} parent=1 // pred_check_branch
      %161 = sbr.rel (0) target = $region25
    $region24: #{tpu_custom_call.1} parent=1 // pred_region
      _
    $region25: #{tpu_custom_call.1} parent=1 // pred_fallthru
      _
    // Predicated region
    $region26: #{tpu_custom_call.1} parent=1 // pred_check
      _
    $region27: #{tpu_custom_call.1} parent=1 // pred_check_branch
      %163 = sbr.rel (0) target = $region29
    $region28: #{tpu_custom_call.1} parent=1 // pred_region
      _
    $region29: #{tpu_custom_call.1} parent=1 // pred_fallthru
      _
    %164 = vsyncpa [#allocation3], 1

</llo_original>
